<compile_context>
chip_gen: v7x
topology: tpu7x:2x2x1
jax: 0.10.0
libtpu: 0.0.40
codegen_flags: <defaults>
</compile_context>

<pallas_src>
import jax
import jax.numpy as jnp
from jax import lax
from jax.experimental import pallas as pl
from jax.experimental.pallas import tpu as pltpu

_LANES = 128
_SUBLANES = 8
_CHUNK_ROWS = 512                        # inner strip: bounds in-kernel temporaries
_DEFAULT_BLOCK_BYTES = 4 * 1024 * 1024   # per-input, per-pipeline-buffer budget
_VMEM_LIMIT_BYTES = 48 * 1024 * 1024     # > v5e 16 MiB scoped default, < v7x 64 MiB/TC


def _round_up(a, b):
    return ((a + b - 1) // b) * b


def _huber2(x, y):
    """Per-element 2 * smooth_l1(beta=1); the 0.5 is folded into the wrapper."""
    d = x.astype(jnp.float32) - y.astype(jnp.float32)
    ad = jnp.abs(d)
    c = jnp.minimum(ad, 1.0)
    # ad < 1: c=ad -> ad^2 ;  ad >= 1: c=1 -> 2*ad - 1   (both == 2*huber)
    return c * (ad + ad - c)


def _make_kernel(block_rows, chunk_rows, n_chunks, num_blocks, needs_mask, tail_valid):
    """Kernel writing a per-block (8,128) f32 partial sum of 2*smooth_l1 terms."""

    def kernel(x_ref, y_ref, o_ref):
        def chunk_term(base):
            x = x_ref[pl.ds(base, chunk_rows), :]
            y = y_ref[pl.ds(base, chunk_rows), :]
            return _huber2(x, y)

        def reduce_chunk(term):
            # Tile-preserving reshape -> chain of VPU vadds into one vreg.
            return term.reshape(chunk_rows // _SUBLANES, _SUBLANES, _LANES).sum(axis=0)

        def partial_sum(masked):
            acc = jnp.zeros((_SUBLANES, _LANES), jnp.float32)
            for j in range(n_chunks):          # static unroll; static slice starts
                base = j * chunk_rows
                if masked and base >= tail_valid:
                    break                      # chunk fully out of bounds: contributes 0
                term = chunk_term(base)
                if masked and base + chunk_rows > tail_valid:
                    # Only the straddling chunk pays iota + cmp + select.
                    row = lax.broadcasted_iota(
                        jnp.int32, (chunk_rows, _LANES), 0) + base
                    term = jnp.where(row < tail_valid, term, 0.0)
                acc = acc + reduce_chunk(term)
            return acc

        if not needs_mask:
            o_ref[...] = partial_sum(False)
        elif num_blocks == 1:
            # The only block is the last block: it always keeps its mask.
            o_ref[...] = partial_sum(True)
        else:
            i = pl.program_id(0)
            last = pl.num_programs(0) - 1

            @pl.when(i != last)
            def _():
                o_ref[...] = partial_sum(False)

            @pl.when(i == last)
            def _():
                o_ref[...] = partial_sum(True)

    return kernel


def smooth_l1_loss(x, label, *, block_bytes=_DEFAULT_BLOCK_BYTES):
    """Equivalent of torch.nn.functional.smooth_l1_loss(x, label) (mean, beta=1)."""
    assert x.shape == label.shape, "x and label must have the same shape"
    n = x.size
    assert n > 0

    itemsize = jnp.dtype(x.dtype).itemsize
    xf = x.reshape(-1)
    yf = label.reshape(-1)

    rem = n % _LANES
    main = n - rem

    total2 = jnp.float32(0.0)
    if rem:
        # TODO(synk): a fully zero-copy ragged path needs memory_space=pl.ANY +
        # manual DMA; here the <128-element remainder is summed in plain JAX.
        total2 = total2 + jnp.sum(_huber2(xf[main:], yf[main:]))

    if main:
        x_main = xf if rem == 0 else xf[:main]
        y_main = yf if rem == 0 else yf[:main]
        rows = main // _LANES
        x2 = x_main.reshape(rows, _LANES)
        y2 = y_main.reshape(rows, _LANES)

        # Block sizing: ~block_bytes of this input per pipeline buffer.
        cap_rows = max(
            _SUBLANES,
            (block_bytes // (_LANES * itemsize)) // _SUBLANES * _SUBLANES,
        )
        chunk_rows = min(_CHUNK_ROWS, cap_rows, _round_up(rows, _SUBLANES))
        cap_rows = max(chunk_rows, (cap_rows // chunk_rows) * chunk_rows)
        block_rows = min(cap_rows, _round_up(rows, chunk_rows))
        num_blocks = pl.cdiv(rows, block_rows)
        needs_mask = (num_blocks * block_rows) != rows
        tail_valid = rows - (num_blocks - 1) * block_rows
        n_chunks = block_rows // chunk_rows

        kernel = _make_kernel(
            block_rows, chunk_rows, n_chunks, num_blocks, needs_mask, tail_valid
        )

        # TODO(synk): verify via xprof that the "parallel" axis is actually
        # sharded across both TensorCores on v7x (else add an explicit core axis).
        partial = pl.pallas_call(
            kernel,
            out_shape=jax.ShapeDtypeStruct(
                (num_blocks * _SUBLANES, _LANES), jnp.float32
            ),
            grid_spec=pltpu.PrefetchScalarGridSpec(
                num_scalar_prefetch=0,
                grid=(num_blocks,),
                in_specs=[
                    pl.BlockSpec((block_rows, _LANES), lambda i: (i, 0)),
                    pl.BlockSpec((block_rows, _LANES), lambda i: (i, 0)),
                ],
                out_specs=pl.BlockSpec((_SUBLANES, _LANES), lambda i: (i, 0)),
            ),
            compiler_params=pltpu.CompilerParams(
                dimension_semantics=("parallel",),
                vmem_limit_bytes=_VMEM_LIMIT_BYTES,
            ),
            cost_estimate=pl.CostEstimate(
                flops=6 * main,
                transcendentals=0,
                bytes_accessed=2 * main * itemsize
                + num_blocks * _SUBLANES * _LANES * 4,
            ),
        )(x2, y2)
        total2 = total2 + jnp.sum(partial)

    # Fold in the deferred 0.5 and the mean over the ORIGINAL element count.
    return total2 * jnp.float32(0.5 / n)


def _reference(x, label):
    d = x.astype(jnp.float32) - label.astype(jnp.float32)
    ad = jnp.abs(d)
    return jnp.mean(jnp.where(ad < 1.0, 0.5 * d * d, ad - 0.5))


if __name__ == "__main__":
    key = jax.random.PRNGKey(0)
    keys = jax.random.split(key, 10)

    def check(x, label, **kw):
        loss = smooth_l1_loss(x, label, **kw)
        jax.block_until_ready(loss)
        ref = _reference(x, label)
        assert jnp.allclose(loss, ref, rtol=1e-5, atol=1e-6), (x.shape, loss, ref)

    # 1. Module-typical NCHW, lane-aligned (zero-copy fast path).
    x = jax.random.normal(keys[0], (2, 4, 16, 16), dtype=jnp.float32)
    y = jax.random.normal(keys[1], (2, 4, 16, 16), dtype=jnp.float32)
    check(x, y)

    # 2. Ragged element count: plain-JAX tail (<128 elems) + masked partial block.
    x = jax.random.normal(keys[2], (3, 5, 17, 13), dtype=jnp.float32)
    y = jax.random.normal(keys[3], (3, 5, 17, 13), dtype=jnp.float32)
    check(x, y)

    # 3. Multi-chunk block with a masked straddling chunk (rows=1040).
    x = jax.random.normal(keys[4], (2, 4, 128, 130), dtype=jnp.float32)
    y = jax.random.normal(keys[5], (2, 4, 128, 130), dtype=jnp.float32)
    check(x, y)

    # 4. Force a multi-block grid (exercises the pl.when last-block mask path).
    x = jax.random.normal(keys[6], (3, 5, 32, 20), dtype=jnp.float32)
    y = jax.random.normal(keys[7], (3, 5, 32, 20), dtype=jnp.float32)
    check(x, y, block_bytes=8192)

    # 5. bf16 inputs streamed natively, upcast in-kernel.
    x = jax.random.normal(keys[8], (2, 4, 16, 16), dtype=jnp.bfloat16)
    y = jax.random.normal(keys[9], (2, 4, 16, 16), dtype=jnp.bfloat16)
    check(x, y)

    print("KERNEL_OK")
</pallas_src>

<mosaic_0001>
module attributes {stable_mosaic.version = 11 : i64} {
  func.func @kernel(%arg0: i32, %arg1: memref<16x128xf32, #tpu.memory_space<vmem>>, %arg2: memref<16x128xf32, #tpu.memory_space<vmem>>, %arg3: memref<8x128xf32, #tpu.memory_space<vmem>>) attributes {dimension_semantics = [#tpu.dimension_semantics<parallel>], iteration_bounds = array<i64: 1>, scalar_prefetch = 0 : i64, scratch_operands = 0 : i64, tpu.core_type = #tpu.core_type<tc>, window_params = [{transform_indices = @transform_0, window_bounds = array<i64: 16, 128>}, {transform_indices = @transform_1, window_bounds = array<i64: 16, 128>}, {transform_indices = @transform_2, window_bounds = array<i64: 8, 128>}]} {
    %cst = arith.constant 0.000000e+00 : f32
    %0 = vector.broadcast %cst : f32 to vector<8x128xf32>
    %c0 = arith.constant 0 : index
    %c0_0 = arith.constant 0 : index
    %1 = vector.load %arg1[%c0, %c0_0] : memref<16x128xf32, #tpu.memory_space<vmem>>, vector<16x128xf32>
    %c0_1 = arith.constant 0 : index
    %c0_2 = arith.constant 0 : index
    %2 = vector.load %arg2[%c0_1, %c0_2] : memref<16x128xf32, #tpu.memory_space<vmem>>, vector<16x128xf32>
    %3 = arith.subf %1, %2 : vector<16x128xf32>
    %4 = math.absf %3 : vector<16x128xf32>
    %cst_3 = arith.constant 1.000000e+00 : f32
    %5 = vector.broadcast %cst_3 : f32 to vector<16x128xf32>
    %6 = arith.minimumf %4, %5 : vector<16x128xf32>
    %7 = arith.addf %4, %4 : vector<16x128xf32>
    %8 = arith.subf %7, %6 : vector<16x128xf32>
    %9 = arith.mulf %6, %8 : vector<16x128xf32>
    %10 = vector.shape_cast %9 : vector<16x128xf32> to vector<2x8x128xf32>
    %cst_4 = arith.constant dense<0.000000e+00> : vector<8x128xf32>
    %11 = vector.multi_reduction <add>, %10, %cst_4 [0] : vector<2x8x128xf32> to vector<8x128xf32>
    %12 = arith.addf %0, %11 : vector<8x128xf32>
    %c0_5 = arith.constant 0 : index
    %c0_6 = arith.constant 0 : index
    %13 = vector.load %arg3[%c0_5, %c0_6] : memref<8x128xf32, #tpu.memory_space<vmem>>, vector<8x128xf32>
    tpu.vector_store %arg3[%c0_5, %c0_6], %12 {strides = array<i32>} : memref<8x128xf32, #tpu.memory_space<vmem>>, vector<8x128xf32>,
    return
  }
  func.func @transform_0(%arg0: i32) -> (i32, i32) {
    %c0_i32 = arith.constant 0 : i32
    %c0_i32_0 = arith.constant 0 : i32
    return %arg0, %c0_i32 : i32, i32
  }
  func.func @transform_1(%arg0: i32) -> (i32, i32) {
    %c0_i32 = arith.constant 0 : i32
    %c0_i32_0 = arith.constant 0 : i32
    return %arg0, %c0_i32 : i32, i32
  }
  func.func @transform_2(%arg0: i32) -> (i32, i32) {
    %c0_i32 = arith.constant 0 : i32
    %c0_i32_0 = arith.constant 0 : i32
    return %arg0, %c0_i32 : i32, i32
  }
}

</mosaic_0001>

<llo_original>
// kernel: tpu_custom_call.1
$region0: #{tpu_custom_call.1}
  #allocation0 [shape = 'u32[]', space=smem, size = 0x4, offset = 0x4, fixed_abs, tag = 'smem constant byte address 0x4 - core index']
  #allocation1 [shape = 'u32[144,128]{1,0:T(1,128)}', space=vmem, size = 0x12000, scoped, tag = 'internal scratch']
  %s0 = inlined_call_operand.hbm [shape: f32[16,128], index: 0, kind: input, shape index: {}]
  %s1 = inlined_call_operand.hbm [shape: f32[16,128], index: 1, kind: input, shape index: {}]
  %s2 = inlined_call_operand.hbm [shape: f32[8,128], index: 2, kind: output, shape index: {}]
  %s3 = sld [smem:[#allocation0]]
  $region26: #{tpu_custom_call.1} parent=0
    _
  %s5 = ssub.s32 1, %s3
  %s6 = scalar_select 0, %s5, %s3
  $region1: #{tpu_custom_call.1} parent=0
    #allocation2 [shape = 'u8[8192]{0}', space=vmem, size = 0x2000, scoped, tag = 'input window, operand 0, single buffered']
    #allocation3 [shape = 's32[1]{0}', space=sflag, size = 0x4, scoped, tag = 'scoped memory for tpu_custom_call.1']
    #allocation4 [shape = 's32[1]{0}', space=sflag, size = 0x4, scoped, tag = 'scoped memory for tpu_custom_call.1']
    #allocation5 [shape = 'u8[8192]{0}', space=vmem, size = 0x2000, scoped, tag = 'input window, operand 1, single buffered']
    #allocation6 [shape = 's32[1]{0}', space=sflag, size = 0x4, scoped, tag = 'scoped memory for tpu_custom_call.1']
    #allocation7 [shape = 'u8[4096]{0}', space=vmem, size = 0x1000, scoped, tag = 'output window, operand 0, single buffered']
    %7 = vsyncpa [#allocation3], 0
    %8 = vsyncpa [#allocation6], 0
    %9 = vsyncpa [#allocation4], 0
    // Predicated region
    $region2: #{tpu_custom_call.1} parent=1 // pred_check
      _
    $region3: #{tpu_custom_call.1} parent=1 // pred_check_branch
      %11 = sbr.rel (0) target = $region5
    $region4: #{tpu_custom_call.1} parent=1 // pred_region
      %s13 = ssub.s32 256, 256
      %14 = vsyncadd [#allocation3], %s13
      %s15 = sshll.u32 [#allocation2], 4
      %s16 = int_to_ptr.vmem [resolvable:$true] %s15
      %21 = dma.hbm_to_vmem [thread:$0]  %s0, 256, %s16, [#allocation3], 128, 128, 8
    $region5: #{tpu_custom_call.1} parent=1 // pred_fallthru
      _
    // Predicated region
    $region6: #{tpu_custom_call.1} parent=1 // pred_check
      _
    $region7: #{tpu_custom_call.1} parent=1 // pred_check_branch
      %23 = sbr.rel (0) target = $region9
    $region8: #{tpu_custom_call.1} parent=1 // pred_region
      %s25 = ssub.s32 256, 256
      %26 = vsyncadd [#allocation6], %s25
      %s27 = sshll.u32 [#allocation5], 4
      %s28 = int_to_ptr.vmem [resolvable:$true] %s27
      %33 = dma.hbm_to_vmem [thread:$0]  %s1, 256, %s28, [#allocation6], 128, 128, 8
    $region9: #{tpu_custom_call.1} parent=1 // pred_fallthru
      _
    // Predicated region
    $region10: #{tpu_custom_call.1} parent=1 // pred_check
      _
    $region11: #{tpu_custom_call.1} parent=1 // pred_check_branch
      %35 = sbr.rel (0) target = $region13
    $region12: #{tpu_custom_call.1} parent=1 // pred_region
      %36 = dma.done [#allocation3], 256
    $region13: #{tpu_custom_call.1} parent=1 // pred_fallthru
      _
    // Predicated region
    $region14: #{tpu_custom_call.1} parent=1 // pred_check
      _
    $region15: #{tpu_custom_call.1} parent=1 // pred_check_branch
      %38 = sbr.rel (0) target = $region17
    $region16: #{tpu_custom_call.1} parent=1 // pred_region
      %39 = dma.done [#allocation6], 256
    $region17: #{tpu_custom_call.1} parent=1 // pred_fallthru
      _
    %v40 = vld [vmem:[#allocation2] sm:$0xff]
    %v41 = vld [vmem:[#allocation2 + $0x8] sm:$0xff]
    %v42 = vld [vmem:[#allocation5] sm:$0xff]
    %v43 = vld [vmem:[#allocation5 + $0x8] sm:$0xff]
    %v44 = vsub.f32 %v40, %v42
    %v45 = vsub.f32 %v41, %v43
    %v46 = vand.u32 2147483647, %v44
    %v47 = vand.u32 2147483647, %v45
    %v48 = vmin.f32 %v46, 1.0
    %v49 = vmin.f32 %v47, 1.0
    %v50 = vadd.f32 %v46, %v46
    %v51 = vadd.f32 %v47, %v47
    %v52 = vsub.f32 %v50, %v48
    %v53 = vsub.f32 %v51, %v49
    %v54 = vmul.f32 %v48, %v52
    %v55 = vmul.f32 %v49, %v53
    %v56 = vadd.f32 %v54, %v55
    %v57 = vadd.f32 %v56, 0.0
    %58 = vst [vmem:[#allocation7] sm:$0xff] %v57
    // Predicated region
    $region18: #{tpu_custom_call.1} parent=1 // pred_check
      _
    $region19: #{tpu_custom_call.1} parent=1 // pred_check_branch
      %60 = sbr.rel (0) target = $region21
    $region20: #{tpu_custom_call.1} parent=1 // pred_region
      %s62 = ssub.s32 128, 128
      %63 = vsyncadd [#allocation4], %s62
      %s65 = sshll.u32 [#allocation7], 4
      %s66 = int_to_ptr.vmem [resolvable:$true] %s65
      %68 = dma.vmem_to_hbm [thread:$0]  %s66, 128, %s2, [#allocation4]
    $region21: #{tpu_custom_call.1} parent=1 // pred_fallthru
      _
    // Predicated region
    $region22: #{tpu_custom_call.1} parent=1 // pred_check
      _
    $region23: #{tpu_custom_call.1} parent=1 // pred_check_branch
      %70 = sbr.rel (0) target = $region25
    $region24: #{tpu_custom_call.1} parent=1 // pred_region
      %71 = dma.done [#allocation4], 128
    $region25: #{tpu_custom_call.1} parent=1 // pred_fallthru
      _
    %72 = vsyncpa [#allocation3], 1
    %73 = vsyncpa [#allocation6], 1
    %74 = vsyncpa [#allocation4], 1

</llo_original>
